<compile_context>
chip_gen: v6e
topology: v6e:2x2x1
jax: 0.10.0
libtpu: 0.0.40
codegen_flags: <defaults>
</compile_context>

<pallas_src>
import jax
import jax.numpy as jnp
from jax.experimental import pallas as pl
from jax.experimental.pallas import tpu as pltpu


# --------------------------------------------------------------------------- #
# Kernels
# --------------------------------------------------------------------------- #
def _fc_prelu_kernel_single_k(x_ref, w_ref, b_ref, a_ref, o_ref):
    # x_ref: (tm, K)   w_ref: (K, tn)   b_ref: (1, tn) f32
    # a_ref: (1,) f32 in SMEM           o_ref: (tm, tn) out dtype
    y = jnp.dot(x_ref[...], w_ref[...], preferred_element_type=jnp.float32)
    y = y + b_ref[...]                         # bias broadcast over rows (f32)
    alpha = a_ref[0]                           # single shared PReLU parameter
    o_ref[...] = jnp.where(y > 0.0, y, alpha * y).astype(o_ref.dtype)


def _fc_prelu_kernel_multi_k(x_ref, w_ref, b_ref, a_ref, o_ref, acc_ref):
    # x_ref: (tm, tk)   w_ref: (tk, tn)   b_ref: (1, tn) f32
    # a_ref: (1,) f32 in SMEM             o_ref: (tm, tn) out dtype
    # acc_ref: (tm, tn) f32 scratch accumulator (resident across the K axis)
    k = pl.program_id(2)

    @pl.when(k == 0)
    def _init():
        acc_ref[...] = jnp.zeros_like(acc_ref)

    acc_ref[...] += jnp.dot(
        x_ref[...], w_ref[...], preferred_element_type=jnp.float32
    )

    @pl.when(k == pl.num_programs(2) - 1)
    def _finalize():
        y = acc_ref[...] + b_ref[...]
        alpha = a_ref[0]
        o_ref[...] = jnp.where(y > 0.0, y, alpha * y).astype(o_ref.dtype)


# --------------------------------------------------------------------------- #
# Tiling / packing helpers
# --------------------------------------------------------------------------- #
def _round_up(x, m):
    return ((x + m - 1) // m) * m


def _choose_tiles(M, K, N_pad, in_bytes, out_bytes, budget_bytes):
    """Pick (tm, tk, tn) so tk|K, tn|N_pad (exact -> no ragged reduction blocks)
    and the double-buffered working set fits the VMEM budget."""
    def _divisor(dim, cands):
        for c in cands:
            if dim % c == 0:
                return c
        return dim

    tk = K if K <= 2048 else _divisor(K, (512, 256, 128))
    tn = N_pad if N_pad <= 1024 else _divisor(N_pad, (1024, 512, 256, 128))

    def vmem_use(tm):
        return (2 * tm * tk * in_bytes        # x blocks (double buffered)
                + 2 * tk * tn * in_bytes      # w blocks
                + 2 * tn * 4                  # bias blocks
                + 2 * tm * tn * out_bytes     # out blocks
                + tm * tn * 4)                # f32 accumulator (multi-K only)

    tm = 4096
    while tm > 128 and vmem_use(tm) > budget_bytes:
        tm //= 2
    if M > 512:
        # keep at least 2 row tiles so a "parallel" axis exists for megacore.
        half = _round_up(-(-M // 2), 128)
        tm = min(tm, max(128, half))
    if M <= tm:
        tm = M                                # full-extent block is always legal
    return tm, tk, tn, vmem_use(tm)


def pack_params(weight, bias, compute_dtype=jnp.float32):
    """One-time repack of PyTorch-layout params (call once, NOT per step).
    weight: (ft_hidden, ft_in) -> (ft_in, N_pad), N_pad = ceil128(ft_hidden),
    stored in `compute_dtype` (use jnp.bfloat16 on v6e/v7x for MXU throughput).
    bias: (ft_hidden,) -> (1, N_pad) float32."""
    ft_hidden, ft_in = weight.shape
    n_pad = _round_up(ft_hidden, 128)
    w_kn = jnp.zeros((ft_in, n_pad), compute_dtype)
    w_kn = w_kn.at[:, :ft_hidden].set(weight.T.astype(compute_dtype))
    b_1n = jnp.zeros((1, n_pad), jnp.float32)
    b_1n = b_1n.at[:, :ft_hidden].set(bias.astype(jnp.float32))
    return w_kn, b_1n


# --------------------------------------------------------------------------- #
# Wrapper
# --------------------------------------------------------------------------- #
def simple_feature_extractor(seq, w_kn, b_1n, alpha, *, ft_hidden=None,
                             vmem_budget_bytes=24 * 1024 * 1024):
    """seq: (..., ft_in). w_kn/b_1n: from pack_params. alpha: scalar PReLU
    weight. Returns (..., ft_hidden) in seq.dtype."""
    K, N_pad = w_kn.shape
    if ft_hidden is None:
        ft_hidden = N_pad
    lead_shape = seq.shape[:-1]
    assert seq.shape[-1] == K

    x2d = seq.reshape(-1, K)
    if x2d.dtype != w_kn.dtype:
        # Ideally activations already arrive in the compute dtype (fused upstream).
        x2d = x2d.astype(w_kn.dtype)
    M = x2d.shape[0]

    in_bytes = jnp.dtype(w_kn.dtype).itemsize
    out_dtype = seq.dtype
    out_bytes = jnp.dtype(out_dtype).itemsize

    tm, tk, tn, vmem_est = _choose_tiles(
        M, K, N_pad, in_bytes, out_bytes, vmem_budget_bytes)
    kt = K // tk

    alpha_arr = jnp.asarray(alpha, jnp.float32).reshape(1)

    cost = pl.CostEstimate(
        flops=2 * M * K * N_pad,
        transcendentals=0,
        bytes_accessed=(M * K * in_bytes + K * N_pad * in_bytes
                        + M * N_pad * out_bytes),
    )
    vmem_limit = int(min(64 * 1024 * 1024,
                         max(32 * 1024 * 1024, 1.25 * vmem_est)))

    if kt == 1:
        # Common case: whole reduction in one block -> fully fused single pass.
        grid_spec = pltpu.PrefetchScalarGridSpec(
            num_scalar_prefetch=0,
            grid=(pl.cdiv(M, tm), N_pad // tn),
            in_specs=[
                pl.BlockSpec((tm, K), lambda i, j: (i, 0)),            # x
                pl.BlockSpec((K, tn), lambda i, j: (0, j)),            # weight
                pl.BlockSpec((1, tn), lambda i, j: (0, j)),            # bias
                pl.BlockSpec(memory_space=pltpu.MemorySpace.SMEM),     # alpha
            ],
            out_specs=pl.BlockSpec((tm, tn), lambda i, j: (i, j)),
        )
        kernel = _fc_prelu_kernel_single_k
        dim_sem = ("parallel", "parallel")
    else:
        grid_spec = pltpu.PrefetchScalarGridSpec(
            num_scalar_prefetch=0,
            grid=(pl.cdiv(M, tm), N_pad // tn, kt),
            in_specs=[
                pl.BlockSpec((tm, tk), lambda i, j, k: (i, k)),        # x
                pl.BlockSpec((tk, tn), lambda i, j, k: (k, j)),        # weight
                pl.BlockSpec((1, tn), lambda i, j, k: (0, j)),         # bias
                pl.BlockSpec(memory_space=pltpu.MemorySpace.SMEM),     # alpha
            ],
            out_specs=pl.BlockSpec((tm, tn), lambda i, j, k: (i, j)),
            scratch_shapes=[pltpu.VMEM((tm, tn), jnp.float32)],
        )
        kernel = _fc_prelu_kernel_multi_k
        dim_sem = ("parallel", "parallel", "arbitrary")

    out = pl.pallas_call(
        kernel,
        out_shape=jax.ShapeDtypeStruct((M, N_pad), out_dtype),
        grid_spec=grid_spec,
        compiler_params=pltpu.CompilerParams(
            dimension_semantics=dim_sem,
            vmem_limit_bytes=vmem_limit,
        ),
        cost_estimate=cost,
    )(x2d, w_kn, b_1n, alpha_arr)

    if ft_hidden != N_pad:
        out = out[:, :ft_hidden]
    return out.reshape(*lead_shape, ft_hidden)


def init_params(key, ft_in, ft_hidden):
    """Deterministic init matching the PyTorch module:
    xavier_uniform_ on Linear weight, zero bias, PReLU alpha = 0.25."""
    limit = jnp.sqrt(6.0 / (ft_in + ft_hidden))
    weight = jax.random.uniform(
        key, (ft_hidden, ft_in), minval=-limit, maxval=limit, dtype=jnp.float32)
    bias = jnp.zeros((ft_hidden,), jnp.float32)
    alpha = jnp.float32(0.25)
    return weight, bias, alpha


# --------------------------------------------------------------------------- #
# Self-test
# --------------------------------------------------------------------------- #
if __name__ == "__main__":
    key = jax.random.PRNGKey(0)
    k_x, k_w, k_x2, k_w2, k_x3, k_w3 = jax.random.split(key, 6)

    def ref_fwd(seq, weight, bias, alpha):
        y = seq @ weight.T + bias
        return jnp.where(y > 0, y, alpha * y)

    # --- small shape (toy config of the module) ------------------------------
    batch, seqlen, ft_in, ft_hidden = 2, 8, 32, 32
    seq = jax.random.normal(k_x, (batch, seqlen, ft_in), dtype=jnp.float32)
    weight, bias, alpha = init_params(k_w, ft_in, ft_hidden)
    ref = ref_fwd(seq, weight, bias, alpha)

    # f32 MXU path (exact parity with the reference).
    w_kn, b_1n = pack_params(weight, bias, compute_dtype=jnp.float32)
    out = jax.block_until_ready(
        simple_feature_extractor(seq, w_kn, b_1n, alpha, ft_hidden=ft_hidden))
    assert out.shape == (batch, seqlen, ft_hidden)
    assert jnp.allclose(out, ref, atol=1e-5, rtol=1e-5)

    # bf16 MXU operands (f32 accumulation) — looser tolerance.
    w_bf, b_bf = pack_params(weight, bias, compute_dtype=jnp.bfloat16)
    out_bf = jax.block_until_ready(
        simple_feature_extractor(seq, w_bf, b_bf, alpha, ft_hidden=ft_hidden))
    assert out_bf.shape == (batch, seqlen, ft_hidden)
    assert jnp.allclose(out_bf.astype(jnp.float32), ref, atol=5e-2, rtol=5e-2)

    # --- ragged row tiles + padded-N (ft_hidden not a multiple of 128) -------
    b2, s2, fi2, fh2 = 3, 257, 96, 160
    seq2 = jax.random.normal(k_x2, (b2, s2, fi2), dtype=jnp.float32)
    w2, bb2, a2 = init_params(k_w2, fi2, fh2)
    wk2, bn2 = pack_params(w2, bb2, compute_dtype=jnp.float32)
    out2 = jax.block_until_ready(
        simple_feature_extractor(seq2, wk2, bn2, a2, ft_hidden=fh2))
    ref2 = ref_fwd(seq2, w2, bb2, a2)
    assert out2.shape == (b2, s2, fh2)
    assert jnp.allclose(out2, ref2, atol=1e-4, rtol=1e-4)

    # --- large ft_in exercising the multi-K reduction path -------------------
    b3, s3, fi3, fh3 = 2, 64, 4096, 256
    seq3 = jax.random.normal(k_x3, (b3, s3, fi3), dtype=jnp.float32)
    w3, bb3, a3 = init_params(k_w3, fi3, fh3)
    wk3, bn3 = pack_params(w3, bb3, compute_dtype=jnp.float32)
    out3 = jax.block_until_ready(
        simple_feature_extractor(seq3, wk3, bn3, a3, ft_hidden=fh3))
    ref3 = ref_fwd(seq3, w3, bb3, a3)
    assert out3.shape == (b3, s3, fh3)
    assert jnp.allclose(out3, ref3, atol=2e-3, rtol=2e-3)

    print("KERNEL_OK")
</pallas_src>

<mosaic_0001>
module attributes {stable_mosaic.version = 11 : i64} {
  func.func @_fc_prelu_kernel_single_k(%arg0: i32, %arg1: i32, %arg2: memref<16x32xf32, #tpu.memory_space<vmem>>, %arg3: memref<32x128xf32, #tpu.memory_space<vmem>>, %arg4: memref<1x128xf32, #tpu.memory_space<vmem>>, %arg5: memref<1xf32, #tpu.memory_space<smem>>, %arg6: memref<16x128xf32, #tpu.memory_space<vmem>>) attributes {dimension_semantics = [#tpu.dimension_semantics<parallel>, #tpu.dimension_semantics<parallel>], iteration_bounds = array<i64: 1, 1>, scalar_prefetch = 0 : i64, scratch_operands = 0 : i64, tpu.core_type = #tpu.core_type<tc>, window_params = [{transform_indices = @transform_0, window_bounds = array<i64: 16, 32>}, {transform_indices = @transform_1, window_bounds = array<i64: 32, 128>}, {transform_indices = @transform_2, window_bounds = array<i64: 1, 128>}, {transform_indices = @transform_3, window_bounds = array<i64: 1>}, {transform_indices = @transform_4, window_bounds = array<i64: 16, 128>}]} {
    %c0 = arith.constant 0 : index
    %c0_0 = arith.constant 0 : index
    %0 = vector.load %arg2[%c0, %c0_0] : memref<16x32xf32, #tpu.memory_space<vmem>>, vector<16x32xf32>
    %c0_1 = arith.constant 0 : index
    %c0_2 = arith.constant 0 : index
    %1 = vector.load %arg3[%c0_1, %c0_2] : memref<32x128xf32, #tpu.memory_space<vmem>>, vector<32x128xf32>
    %cst = arith.constant dense<0.000000e+00> : vector<16x128xf32>
    %2 = tpu.matmul %0, %1, %cst {dimension_numbers = #tpu.dot_dimension_numbers<[1], [0], [0], [1], [0, 0, 1, 1], [], []>} : vector<16x32xf32>, vector<32x128xf32>, vector<16x128xf32> -> vector<16x128xf32>
    %c0_3 = arith.constant 0 : index
    %c0_4 = arith.constant 0 : index
    %3 = vector.load %arg4[%c0_3, %c0_4] : memref<1x128xf32, #tpu.memory_space<vmem>>, vector<1x128xf32>
    %4 = vector.broadcast %3 : vector<1x128xf32> to vector<16x128xf32>
    %5 = arith.addf %2, %4 : vector<16x128xf32>
    %c0_5 = arith.constant 0 : index
    %6 = memref.load %arg5[%c0_5] : memref<1xf32, #tpu.memory_space<smem>>
    %cst_6 = arith.constant 0.000000e+00 : f32
    %7 = vector.broadcast %cst_6 : f32 to vector<16x128xf32>
    %8 = arith.cmpf ogt, %5, %7 : vector<16x128xf32>
    %9 = vector.broadcast %6 : f32 to vector<16x128xf32>
    %10 = arith.mulf %9, %5 : vector<16x128xf32>
    %11 = arith.select %8, %5, %10 : vector<16x128xi1>, vector<16x128xf32>
    %c0_7 = arith.constant 0 : index
    %c0_8 = arith.constant 0 : index
    %12 = vector.load %arg6[%c0_7, %c0_8] : memref<16x128xf32, #tpu.memory_space<vmem>>, vector<16x128xf32>
    tpu.vector_store %arg6[%c0_7, %c0_8], %11 {strides = array<i32>} : memref<16x128xf32, #tpu.memory_space<vmem>>, vector<16x128xf32>,
    return
  }
  func.func @transform_0(%arg0: i32, %arg1: i32) -> (i32, i32) {
    %c0_i32 = arith.constant 0 : i32
    %c0_i32_0 = arith.constant 0 : i32
    return %arg0, %c0_i32 : i32, i32
  }
  func.func @transform_1(%arg0: i32, %arg1: i32) -> (i32, i32) {
    %c0_i32 = arith.constant 0 : i32
    %c0_i32_0 = arith.constant 0 : i32
    return %c0_i32, %arg1 : i32, i32
  }
  func.func @transform_2(%arg0: i32, %arg1: i32) -> (i32, i32) {
    %c0_i32 = arith.constant 0 : i32
    %c0_i32_0 = arith.constant 0 : i32
    return %c0_i32, %arg1 : i32, i32
  }
  func.func @transform_3(%arg0: i32, %arg1: i32) -> i32 {
    %c0_i32 = arith.constant 0 : i32
    %c0_i32_0 = arith.constant 0 : i32
    return %c0_i32 : i32
  }
  func.func @transform_4(%arg0: i32, %arg1: i32) -> (i32, i32) {
    %c0_i32 = arith.constant 0 : i32
    return %arg0, %arg1 : i32, i32
  }
}

</mosaic_0001>

<llo_original>
// kernel: tpu_custom_call.1
$region0: #{tpu_custom_call.1}
  #allocation0 [shape = 'u32[]', space=smem, size = 0x4, offset = 0x4, fixed_abs, tag = 'smem constant byte address 0x4 - core index']
  #allocation1 [shape = 'u32[144,128]{1,0:T(1,128)}', space=vmem, size = 0x12000, scoped, tag = 'internal scratch']
  #allocation2 [shape = 'f32[1]{0:T(128)S(6)}', space=smem, size = 0x200, scoped, tag = 'scoped memory for tpu_custom_call.1']
  %s0 = inlined_call_operand.hbm [shape: f32[16,32], index: 0, kind: input, shape index: {}]
  %s1 = inlined_call_operand.hbm [shape: f32[32,128], index: 1, kind: input, shape index: {}]
  %s2 = inlined_call_operand.vmem [shape: f32[1,128], index: 2, kind: input, shape index: {}]
  %s3 = inlined_call_operand.<no memory space> [shape: f32[1], index: 3, kind: input, shape index: {}]
  %s4 = inlined_call_operand.hbm [shape: f32[16,128], index: 4, kind: output, shape index: {}]
  %s5 = sld [smem:[#allocation0]]
  $region34: #{tpu_custom_call.1} parent=0
    _
  %s7 = ssub.s32 1, %s5
  %s8 = scalar_select 0, %s7, %s5
  %9 = sst [smem:[#allocation2]] %s3
  $region1: #{tpu_custom_call.1} parent=0
    #allocation3 [shape = 'u8[8192]{0}', space=vmem, size = 0x2000, scoped, tag = 'input window, operand 0, single buffered']
    #allocation4 [shape = 's32[1]{0}', space=sflag, size = 0x4, scoped, tag = 'scoped memory for tpu_custom_call.1']
    #allocation5 [shape = 's32[1]{0}', space=sflag, size = 0x4, scoped, tag = 'scoped memory for tpu_custom_call.1']
    #allocation6 [shape = 'u8[16384]{0}', space=vmem, size = 0x4000, scoped, tag = 'input window, operand 1, single buffered']
    #allocation7 [shape = 's32[1]{0}', space=sflag, size = 0x4, scoped, tag = 'scoped memory for tpu_custom_call.1']
    #allocation8 [shape = 'u8[8192]{0}', space=vmem, size = 0x2000, scoped, tag = 'output window, operand 0, single buffered']
    %10 = vsyncpa [#allocation4], 0
    %11 = vsyncpa [#allocation7], 0
    %12 = vsyncpa [#allocation5], 0
    // Predicated region
    $region2: #{tpu_custom_call.1} parent=1 // pred_check
      _
    $region3: #{tpu_custom_call.1} parent=1 // pred_check_branch
      %14 = sbr.rel (0) target = $region5
    $region4: #{tpu_custom_call.1} parent=1 // pred_region
      %s16 = ssub.s32 256, 256
      %17 = vsyncadd [#allocation4], %s16
      %s18 = sshll.u32 [#allocation3], 4
      %s19 = int_to_ptr.vmem [resolvable:$true] %s18
      %24 = dma.hbm_to_vmem [thread:$0]  %s0, 256, %s19, [#allocation4], 128, 128, 8
    $region5: #{tpu_custom_call.1} parent=1 // pred_fallthru
      _
    // Predicated region
    $region6: #{tpu_custom_call.1} parent=1 // pred_check
      _
    $region7: #{tpu_custom_call.1} parent=1 // pred_check_branch
      %26 = sbr.rel (0) target = $region9
    $region8: #{tpu_custom_call.1} parent=1 // pred_region
      %s28 = ssub.s32 512, 512
      %29 = vsyncadd [#allocation7], %s28
      %s30 = sshll.u32 [#allocation6], 4
      %s31 = int_to_ptr.vmem [resolvable:$true] %s30
      %36 = dma.hbm_to_vmem [thread:$0]  %s1, 512, %s31, [#allocation7], 128, 128, 8
    $region9: #{tpu_custom_call.1} parent=1 // pred_fallthru
      _
    // Predicated region
    $region10: #{tpu_custom_call.1} parent=1 // pred_check
      _
    $region11: #{tpu_custom_call.1} parent=1 // pred_check_branch
      %38 = sbr.rel (0) target = $region13
    $region12: #{tpu_custom_call.1} parent=1 // pred_region
      _
    $region13: #{tpu_custom_call.1} parent=1 // pred_fallthru
      _
    // Predicated region
    $region14: #{tpu_custom_call.1} parent=1 // pred_check
      _
    $region15: #{tpu_custom_call.1} parent=1 // pred_check_branch
      %40 = sbr.rel (0) target = $region17
    $region16: #{tpu_custom_call.1} parent=1 // pred_region
      _
    $region17: #{tpu_custom_call.1} parent=1 // pred_fallthru
      _
    // Predicated region
    $region18: #{tpu_custom_call.1} parent=1 // pred_check
      _
    $region19: #{tpu_custom_call.1} parent=1 // pred_check_branch
      %42 = sbr.rel (0) target = $region21
    $region20: #{tpu_custom_call.1} parent=1 // pred_region
      %43 = dma.done [#allocation4], 256
    $region21: #{tpu_custom_call.1} parent=1 // pred_fallthru
      _
    // Predicated region
    $region22: #{tpu_custom_call.1} parent=1 // pred_check
      _
    $region23: #{tpu_custom_call.1} parent=1 // pred_check_branch
      %45 = sbr.rel (0) target = $region25
    $region24: #{tpu_custom_call.1} parent=1 // pred_region
      %46 = dma.done [#allocation7], 512
    $region25: #{tpu_custom_call.1} parent=1 // pred_fallthru
      _
    %v47 = vld [vmem:[#allocation3] sm:$0xff]
    %v48 = vld [vmem:[#allocation3 + $0x8] sm:$0xff]
    %v49 = vld [vmem:[#allocation6] sm:$0xff]
    %v50 = vld [vmem:[#allocation6 + $0x8] sm:$0xff]
    %v51 = vld [vmem:[#allocation6 + $0x10] sm:$0xff]
    %v52 = vld [vmem:[#allocation6 + $0x18] sm:$0xff]
    %v53 = vld [vmem:[%s2] sm:$0x1]
    %v55 = vlaneseq
    %v56 = vshrl.u32 %v55, 7
    %v57 = vsub.s32 0, %v56
    %v58 = vrot.slane %v53, %v57
    %vm60 = vcmask 261120
    %v62 = vsel %vm60, %v47, 0
    %v65 = vsel %vm60, %v48, 0
    %67 = vmatprep.subr.mxu0 0.0
    %68 = vmatpush1.msra.mxu0 0.0
    %69 = vmatprep.subr.mxu0 0.0
    %70 = vmatpush1.msra.mxu0 0.0
    %71 = vmatprep.subr.mxu0 0.0
    %72 = vmatpush1.msra.mxu0 0.0
    %73 = vmatprep.subr.mxu0 0.0
    %74 = vmatpush1.msra.mxu0 0.0
    %75 = vmatprep.subr.mxu0 0.0
    %76 = vmatpush1.msra.mxu0 0.0
    %77 = vmatprep.subr.mxu0 0.0
    %78 = vmatpush1.msra.mxu0 0.0
    %79 = vmatprep.subr.mxu0 0.0
    %80 = vmatpush1.msra.mxu0 0.0
    %81 = vmatprep.subr.mxu0 0.0
    %82 = vmatpush1.msra.mxu0 0.0
    %83 = vmatprep.subr.mxu0 0.0
    %84 = vmatpush1.msra.mxu0 0.0
    %85 = vmatprep.subr.mxu0 0.0
    %86 = vmatpush1.msra.mxu0 0.0
    %87 = vmatprep.subr.mxu0 0.0
    %88 = vmatpush1.msra.mxu0 0.0
    %89 = vmatprep.subr.mxu0 0.0
    %90 = vmatpush1.msra.mxu0 0.0
    %91 = vmatprep.subr.mxu0 0.0
    %92 = vmatpush1.msra.mxu0 %v52
    %93 = vmatprep.subr.mxu0 0.0
    %94 = vmatpush1.msra.mxu0 %v51
    %95 = vmatprep.subr.mxu0 0.0
    %96 = vmatpush1.msra.mxu0 %v50
    %97 = vmatprep.subr.mxu0 0.0
    %98 = vmatpush1.msra.mxu0 %v49
    %99 = vmatprep.subr.mxu0 0.0
    %100 = vmatpush2.msra.mxu0 0.0
    %101 = vmatprep.subr.mxu0 0.0
    %102 = vmatpush2.msra.mxu0 0.0
    %103 = vmatprep.subr.mxu0 0.0
    %104 = vmatpush2.msra.mxu0 0.0
    %105 = vmatprep.subr.mxu0 0.0
    %106 = vmatpush2.msra.mxu0 0.0
    %107 = vmatprep.subr.mxu0 0.0
    %108 = vmatpush2.msra.mxu0 0.0
    %109 = vmatprep.subr.mxu0 0.0
    %110 = vmatpush2.msra.mxu0 0.0
    %111 = vmatprep.subr.mxu0 0.0
    %112 = vmatpush2.msra.mxu0 0.0
    %113 = vmatprep.subr.mxu0 0.0
    %114 = vmatpush2.msra.mxu0 0.0
    %115 = vmatprep.subr.mxu0 0.0
    %116 = vmatpush2.msra.mxu0 0.0
    %117 = vmatprep.subr.mxu0 0.0
    %118 = vmatpush2.msra.mxu0 0.0
    %119 = vmatprep.subr.mxu0 0.0
    %120 = vmatpush2.msra.mxu0 0.0
    %121 = vmatprep.subr.mxu0 0.0
    %122 = vmatpush2.msra.mxu0 0.0
    %123 = vmatprep.subr.mxu0 0.0
    %124 = vmatpush2.msra.mxu0 0.0
    %125 = vmatprep.subr.mxu0 0.0
    %126 = vmatpush2.msra.mxu0 0.0
    %127 = vmatprep.subr.mxu0 0.0
    %128 = vmatpush2.msra.mxu0 0.0
    %129 = vmatprep.subr.mxu0 0.0
    %130 = vmatpush2.msra.mxu0 0.0
    %131 = vmatprep.mubr.f32.mxu0 0.0
    %132 = vmatmul.mubr.f32.gmra.mxu0 %v62
    %v133 = vpop.f32.mrf.mxu0
    %v134 = vadd.f32 %v58, %v133
    %v135 = vpop.f32.mrf.mxu0
    %136 = vmatprep.mubr.f32.mxu0 0.0
    %137 = vmatmul.mubr.f32.gmra.mxu0 %v65
    %v138 = vpop.f32.mrf.mxu0
    %v139 = vadd.f32 %v58, %v138
    %v140 = vpop.f32.mrf.mxu0
    %141 = vdwg.mxu0
    %s142 = sld [smem:[#allocation2]]
    %vm143 = vcmp.gt.f32.partialorder %v134, 0.0
    %vm144 = vcmp.gt.f32.partialorder %v139, 0.0
    %v145 = vstv %s142
    %v146 = vmul.f32 %v145, %v134
    %v147 = vmul.f32 %v145, %v139
    %v148 = vsel %vm143, %v134, %v146
    %v149 = vsel %vm144, %v139, %v147
    %150 = vst [vmem:[#allocation8] sm:$0xff] %v148
    %151 = vst [vmem:[#allocation8 + $0x8] sm:$0xff] %v149
    // Predicated region
    $region26: #{tpu_custom_call.1} parent=1 // pred_check
      _
    $region27: #{tpu_custom_call.1} parent=1 // pred_check_branch
      %153 = sbr.rel (0) target = $region29
    $region28: #{tpu_custom_call.1} parent=1 // pred_region
      %s155 = ssub.s32 256, 256
      %156 = vsyncadd [#allocation5], %s155
      %s157 = sshll.u32 [#allocation8], 4
      %s158 = int_to_ptr.vmem [resolvable:$true] %s157
      %163 = dma.vmem_to_hbm [thread:$0]  %s158, 256, %s4, [#allocation5], 128, 128, 8
    $region29: #{tpu_custom_call.1} parent=1 // pred_fallthru
      _
    // Predicated region
    $region30: #{tpu_custom_call.1} parent=1 // pred_check
      _
    $region31: #{tpu_custom_call.1} parent=1 // pred_check_branch
      %165 = sbr.rel (0) target = $region33
    $region32: #{tpu_custom_call.1} parent=1 // pred_region
      %166 = dma.done [#allocation5], 256
    $region33: #{tpu_custom_call.1} parent=1 // pred_fallthru
      _
    %167 = vsyncpa [#allocation4], 1
    %168 = vsyncpa [#allocation7], 1
    %169 = vsyncpa [#allocation5], 1

</llo_original>
